<compile_context>
chip_gen: v5e
topology: v5e:2x2
jax: 0.10.0
libtpu: 0.0.40
codegen_flags: <defaults>
</compile_context>

<pallas_src>
import functools

import jax
import jax.numpy as jnp
from jax.experimental import pallas as pl
from jax.experimental.pallas import tpu as pltpu


def _margin_loss_csi_kernel(scores_ref, label_ref, out_ref, *, targeted, confidence, clip_max):
    # Load tile in native dtype, cast once in-kernel.
    scores = scores_ref[...].astype(jnp.float32)              # [TB, C]
    label = label_ref[...]                                     # [TB, 1] int32
    tb, c = scores.shape

    # Boolean one-hot mask from a lane-axis iota (no f32 one-hot temporaries).
    class_ids = jax.lax.broadcasted_iota(jnp.int32, (tb, c), dimension=1)
    mask = class_ids == label                                  # [TB, C] bool

    # score_real  = scores[i, label[i]]
    score_real = jnp.sum(jnp.where(mask, scores, jnp.float32(0.0)), axis=1, keepdims=True)
    # score_other = max_{j != label[i]} scores[i, j]; true column forced to exactly
    # -10000, matching the PyTorch sentinel (0*score - 1*10000).
    score_other = jnp.max(jnp.where(mask, jnp.float32(-10000.0), scores), axis=1, keepdims=True)

    conf = jnp.float32(confidence)
    if targeted:
        loss = score_other + conf - score_real
    else:
        loss = score_real + conf - score_other

    # Rows with label == -1 (imposters) contribute 0.  Rows past the true batch
    # size (partial last tile) are discarded by the masked output write.
    loss = jnp.where(label != -1, loss, jnp.float32(0.0))

    if clip_max:
        loss = jnp.maximum(loss, jnp.float32(0.0))

    out_ref[...] = loss


def _choose_tile_b(B, C, itemsize):
    """Batch tile: multiple of the sublane quantum, ~4 MiB of scores per tile,
    capped at 512 rows (safe for v7x's 64 MiB VMEM), never bigger than needed."""
    sub = 8 if itemsize >= 4 else (16 if itemsize == 2 else 32)
    lane_c = ((C + 127) // 128) * 128                  # lane padding of the class axis
    target_rows = max(sub, (4 << 20) // max(1, lane_c * itemsize))
    tile = min(512, (target_rows // sub) * sub)
    b_ceil = ((B + sub - 1) // sub) * sub              # don't exceed one (padded) batch
    tile = min(tile, b_ceil)
    return max(sub, (tile // sub) * sub)


def sec4sr_margin_loss(scores, label, *, targeted=False, confidence=0.0, clip_max=True):
    """Pallas implementation of SEC4SR_MarginLoss.forward for task='CSI'."""
    B, C = scores.shape
    itemsize = jnp.dtype(scores.dtype).itemsize
    tile_b = _choose_tile_b(B, C, itemsize)
    num_tiles = pl.cdiv(B, tile_b)

    label2d = label.astype(jnp.int32).reshape(B, 1)

    kernel = functools.partial(
        _margin_loss_csi_kernel,
        targeted=bool(targeted),
        confidence=float(confidence),
        clip_max=bool(clip_max),
    )

    # VMEM budget: double-buffered scores tile + in-kernel f32 working set + slack.
    lane_c = ((C + 127) // 128) * 128
    scores_tile_bytes = tile_b * lane_c * itemsize
    vmem_limit = int(min(100 << 20,
                         max(16 << 20, 2 * scores_tile_bytes + tile_b * lane_c * 4 + (4 << 20))))

    out = pl.pallas_call(
        kernel,
        out_shape=jax.ShapeDtypeStruct((B, 1), jnp.float32),
        grid=(num_tiles,),
        in_specs=[
            pl.BlockSpec((tile_b, C), lambda i: (i, 0)),   # scores tile (native dtype)
            pl.BlockSpec((tile_b, 1), lambda i: (i, 0)),   # label column
        ],
        out_specs=pl.BlockSpec((tile_b, 1), lambda i: (i, 0)),
        compiler_params=pltpu.CompilerParams(
            dimension_semantics=("parallel",),
            vmem_limit_bytes=vmem_limit,
        ),
    )(scores, label2d)

    return out[:, 0]


def _reference_margin_loss(scores, label, *, targeted=False, confidence=0.0, clip_max=True):
    """Pure-JAX reference mirroring the PyTorch CSI branch (for verification)."""
    B, C = scores.shape
    scores = scores.astype(jnp.float32)
    one_hot = jax.nn.one_hot(jnp.clip(label, 0, C - 1), C, dtype=jnp.float32)
    one_hot = jnp.where((label != -1)[:, None], one_hot, 0.0)
    score_real = jnp.sum(one_hot * scores, axis=1)
    score_other = jnp.max((1.0 - one_hot) * scores - one_hot * 10000.0, axis=1)
    if targeted:
        loss = score_other + confidence - score_real
    else:
        loss = score_real + confidence - score_other
    loss = jnp.where(label != -1, loss, 0.0)
    if clip_max:
        loss = jnp.maximum(loss, 0.0)
    return loss


if __name__ == "__main__":
    key = jax.random.PRNGKey(0)
    k_scores, k_label = jax.random.split(key)

    # Case 1: module-default params (untargeted CSI, confidence=0, clip_max).
    B, NUM_CLASS = 8, 16
    scores = jax.random.normal(k_scores, (B, NUM_CLASS), dtype=jnp.float32)
    label = jax.random.randint(k_label, (B,), minval=-1, maxval=NUM_CLASS, dtype=jnp.int32)

    loss = jax.block_until_ready(
        sec4sr_margin_loss(scores, label, targeted=False, confidence=0.0, clip_max=True))
    ref = _reference_margin_loss(scores, label, targeted=False, confidence=0.0, clip_max=True)
    assert loss.shape == (B,)
    assert jnp.allclose(loss, ref, atol=1e-5), (loss, ref)

    # Case 2: targeted branch + batch size that is not a tile multiple (partial block).
    B2 = 13
    scores2 = jax.random.normal(jax.random.PRNGKey(1), (B2, NUM_CLASS), dtype=jnp.float32)
    label2 = jax.random.randint(jax.random.PRNGKey(2), (B2,), minval=-1, maxval=NUM_CLASS,
                                dtype=jnp.int32)
    loss2 = jax.block_until_ready(
        sec4sr_margin_loss(scores2, label2, targeted=True, confidence=0.5, clip_max=True))
    ref2 = _reference_margin_loss(scores2, label2, targeted=True, confidence=0.5, clip_max=True)
    assert loss2.shape == (B2,)
    assert jnp.allclose(loss2, ref2, atol=1e-5), (loss2, ref2)

    # Case 3: bf16 scores (native-dtype path) with a non-128-multiple class count.
    B3, C3 = 24, 200
    scores3 = jax.random.normal(jax.random.PRNGKey(3), (B3, C3), dtype=jnp.bfloat16)
    label3 = jax.random.randint(jax.random.PRNGKey(4), (B3,), minval=-1, maxval=C3,
                                dtype=jnp.int32)
    loss3 = jax.block_until_ready(
        sec4sr_margin_loss(scores3, label3, targeted=False, confidence=0.1, clip_max=True))
    ref3 = _reference_margin_loss(scores3, label3, targeted=False, confidence=0.1, clip_max=True)
    assert loss3.shape == (B3,)
    assert jnp.allclose(loss3, ref3, atol=1e-2), (loss3, ref3)

    print("KERNEL_OK")
</pallas_src>

<mosaic_0001>
module attributes {stable_mosaic.version = 11 : i64} {
  func.func @_margin_loss_csi_kernel(%arg0: i32, %arg1: memref<8x16xf32, #tpu.memory_space<vmem>>, %arg2: memref<8x1xi32, #tpu.memory_space<vmem>>, %arg3: memref<8x1xf32, #tpu.memory_space<vmem>>) attributes {dimension_semantics = [#tpu.dimension_semantics<parallel>], iteration_bounds = array<i64: 1>, scalar_prefetch = 0 : i64, scratch_operands = 0 : i64, tpu.core_type = #tpu.core_type<tc>, window_params = [{transform_indices = @transform_0, window_bounds = array<i64: 8, 16>}, {transform_indices = @transform_1, window_bounds = array<i64: 8, 1>}, {transform_indices = @transform_2, window_bounds = array<i64: 8, 1>}]} {
    %c0 = arith.constant 0 : index
    %c0_0 = arith.constant 0 : index
    %0 = vector.load %arg1[%c0, %c0_0] : memref<8x16xf32, #tpu.memory_space<vmem>>, vector<8x16xf32>
    %c0_1 = arith.constant 0 : index
    %c0_2 = arith.constant 0 : index
    %1 = vector.load %arg2[%c0_1, %c0_2] : memref<8x1xi32, #tpu.memory_space<vmem>>, vector<8x1xi32>
    %2 = tpu.iota {dimensions = array<i32: 1>} : vector<8x16xi32>
    %3 = vector.broadcast %1 : vector<8x1xi32> to vector<8x16xi32>
    %4 = arith.cmpi eq, %2, %3 : vector<8x16xi32>
    %cst = arith.constant 0.000000e+00 : f32
    %5 = vector.broadcast %cst : f32 to vector<8x16xf32>
    %6 = arith.select %4, %0, %5 : vector<8x16xi1>, vector<8x16xf32>
    %cst_3 = arith.constant dense<0.000000e+00> : vector<8xf32>
    %7 = vector.multi_reduction <add>, %6, %cst_3 [1] : vector<8x16xf32> to vector<8xf32>
    %8 = vector.shape_cast %7 : vector<8xf32> to vector<8x1xf32>
    %cst_4 = arith.constant -1.000000e+04 : f32
    %9 = vector.broadcast %cst_4 : f32 to vector<8x16xf32>
    %10 = arith.select %4, %9, %0 : vector<8x16xi1>, vector<8x16xf32>
    %cst_5 = arith.constant dense<0xFF800000> : vector<8xf32>
    %11 = vector.multi_reduction <maximumf>, %10, %cst_5 [1] : vector<8x16xf32> to vector<8xf32>
    %12 = vector.shape_cast %11 : vector<8xf32> to vector<8x1xf32>
    %cst_6 = arith.constant 0.000000e+00 : f32
    %13 = vector.broadcast %cst_6 : f32 to vector<8x1xf32>
    %14 = arith.addf %8, %13 : vector<8x1xf32>
    %15 = arith.subf %14, %12 : vector<8x1xf32>
    %c-1_i32 = arith.constant -1 : i32
    %16 = vector.broadcast %c-1_i32 : i32 to vector<8x1xi32>
    %17 = arith.cmpi ne, %1, %16 : vector<8x1xi32>
    %cst_7 = arith.constant 0.000000e+00 : f32
    %18 = vector.broadcast %cst_7 : f32 to vector<8x1xf32>
    %19 = arith.select %17, %15, %18 : vector<8x1xi1>, vector<8x1xf32>
    %cst_8 = arith.constant 0.000000e+00 : f32
    %20 = vector.broadcast %cst_8 : f32 to vector<8x1xf32>
    %21 = arith.maximumf %19, %20 : vector<8x1xf32>
    %c0_9 = arith.constant 0 : index
    %c0_10 = arith.constant 0 : index
    %22 = vector.load %arg3[%c0_9, %c0_10] : memref<8x1xf32, #tpu.memory_space<vmem>>, vector<8x1xf32>
    tpu.vector_store %arg3[%c0_9, %c0_10], %21 {strides = array<i32>} : memref<8x1xf32, #tpu.memory_space<vmem>>, vector<8x1xf32>,
    return
  }
  func.func @transform_0(%arg0: i32) -> (i32, i32) {
    %c0_i32 = arith.constant 0 : i32
    %c0_i32_0 = arith.constant 0 : i32
    return %arg0, %c0_i32 : i32, i32
  }
  func.func @transform_1(%arg0: i32) -> (i32, i32) {
    %c0_i32 = arith.constant 0 : i32
    %c0_i32_0 = arith.constant 0 : i32
    return %arg0, %c0_i32 : i32, i32
  }
  func.func @transform_2(%arg0: i32) -> (i32, i32) {
    %c0_i32 = arith.constant 0 : i32
    %c0_i32_0 = arith.constant 0 : i32
    return %arg0, %c0_i32 : i32, i32
  }
}

</mosaic_0001>

<llo_original>
// kernel: tpu_custom_call.1
$region0: #{tpu_custom_call.1}
  #allocation0 [shape = 'u32[]', space=smem, size = 0x4, offset = 0x4, fixed_abs, tag = 'smem constant byte address 0x4 - core index']
  #allocation1 [shape = 'u32[72,128]{1,0:T(1,128)}', space=vmem, size = 0x9000, scoped, tag = 'internal scratch']
  %s0 = inlined_call_operand.vmem [shape: f32[8,16], index: 0, kind: input, shape index: {}]
  %s1 = inlined_call_operand.vmem [shape: s32[8,1], index: 1, kind: input, shape index: {}]
  %s2 = inlined_call_operand.vmem [shape: f32[8,1], index: 2, kind: output, shape index: {}]
  %s3 = sld [smem:[#allocation0]]
  $region18: #{tpu_custom_call.1} parent=0
    _
  %s5 = ssub.s32 1, %s3
  %s6 = scalar_select 0, %s5, %s3
  // Predicated region
  $region2: #{tpu_custom_call.1} parent=0 // pred_check
    _
  $region3: #{tpu_custom_call.1} parent=0 // pred_check_branch
    %8 = sbr.rel (0) target = $region5
  $region4: #{tpu_custom_call.1} parent=0 // pred_region
    _
  $region5: #{tpu_custom_call.1} parent=0 // pred_fallthru
    _
  // Predicated region
  $region6: #{tpu_custom_call.1} parent=0 // pred_check
    _
  $region7: #{tpu_custom_call.1} parent=0 // pred_check_branch
    %10 = sbr.rel (0) target = $region9
  $region8: #{tpu_custom_call.1} parent=0 // pred_region
    _
  $region9: #{tpu_custom_call.1} parent=0 // pred_fallthru
    _
  %v11 = vld [vmem:[%s0] sm:$0xff]
  %v12 = vld [vmem:[%s1] sm:$0xff]
  %v13 = vlaneseq
  %v14 = vand.u32 %v13, 127
  %15 = vset.pattern.permute.xlu0 0
  %16 = vperm.xlu0 %15, %v12
  %v17 = vpop.permute.xlu0 %16
  %vm18 = vcmp.eq.s32.totalorder %v14, %v17
  %v19 = vsel %vm18, %v11, 0.0
  %vm20 = vcmask 130048
  %v21 = vsel %vm20, %v19, 0.0
  %22 = vadd.xlane.f32.xlu0 %v21
  %v23 = vpop.xlane.xlu0 %22
  %v24 = vsel %vm18, -10000.0, %v11
  %v25 = vsel %vm20, %v24, -inf
  %26 = vmax.xlane.f32.xlu0 %v25
  %v27 = vpop.xlane.xlu0 %26
  %v28 = vadd.f32 %v23, 0.0
  %v29 = vsub.f32 %v28, %v27
  %vm30 = vcmp.ne.s32.totalorder %v12, 4294967295
  %v31 = vsel %vm30, %v29, 0.0
  %v32 = vmax.f32 %v31, 0.0
  %vm33 = vcmask 7168
  %34 = vst.msk [vmem:[%s2] sm:$0xff] %vm33, %v32
  // Predicated region
  $region10: #{tpu_custom_call.1} parent=0 // pred_check
    _
  $region11: #{tpu_custom_call.1} parent=0 // pred_check_branch
    %36 = sbr.rel (0) target = $region13
  $region12: #{tpu_custom_call.1} parent=0 // pred_region
    _
  $region13: #{tpu_custom_call.1} parent=0 // pred_fallthru
    _
  // Predicated region
  $region14: #{tpu_custom_call.1} parent=0 // pred_check
    _
  $region15: #{tpu_custom_call.1} parent=0 // pred_check_branch
    %38 = sbr.rel (0) target = $region17
  $region16: #{tpu_custom_call.1} parent=0 // pred_region
    _
  $region17: #{tpu_custom_call.1} parent=0 // pred_fallthru
    _

</llo_original>
